<compile_context>
chip_gen: v6e
topology: v6e:2x2x1
jax: 0.10.0
libtpu: 0.0.40
codegen_flags: <defaults>
</compile_context>

<pallas_src>
import functools

import jax
import jax.numpy as jnp
from jax import lax
from jax.experimental import pallas as pl
from jax.experimental.pallas import tpu as pltpu


def _round_up(x, m):
    return (x + m - 1) // m * m


def _choose_time_chunk(T, B_pad, H_pad, V_pad, budget_bytes=24 << 20):
    """Largest divisor of T whose per-chunk pipelined working set fits the budget."""
    # double-buffered xw-in + logits-out blocks, plus the h_chunk scratch, per timestep
    per_t = B_pad * (2 * (H_pad + V_pad) + H_pad) * 4
    max_tt = max(1, budget_bytes // per_t)
    tt = 1
    for d in range(1, T + 1):
        if T % d == 0 and d <= max_tt:
            tt = d
    return tt


def rnn_chunk_kernel(h0_ref, xw_ref, w_hh_ref, w_out_ref, b_out_ref,
                     out_ref, hT_ref, h_carry_ref, h_chunk_ref, *, unroll):
    """One time-chunk of the fused recurrence + vocab projection.

    h0_ref:      (B, H)     initial hidden state (consumed at grid step 0)
    xw_ref:      (Tt, B, H) chunk of precomputed x_t @ W_ih + (b_ih + b_hh)
    w_hh_ref:    (H, H)     hidden-to-hidden weight (pre-transposed)
    w_out_ref:   (H, V)     output linear weight (pre-transposed, V padded to 128)
    b_out_ref:   (1, V)     output linear bias
    out_ref:     (Tt*B, V)  chunk of logits, time-major flatten (lane-dense store)
    hT_ref:      (B, H)     final hidden state
    h_carry_ref: (B, H)     VMEM scratch carrying h across grid steps
    h_chunk_ref: (Tt*B, H)  VMEM scratch holding this chunk's h_t rows
    """
    @pl.when(pl.program_id(0) == 0)
    def _():
        h_carry_ref[...] = h0_ref[...]

    Tt, B, _ = xw_ref.shape

    # Hoist: w_hh is the single RHS of the only in-loop dot.
    w_hh = w_hh_ref[...]

    def step(t, h):
        h_new = jnp.tanh(
            xw_ref[t]
            + jnp.dot(h, w_hh, preferred_element_type=jnp.float32))
        row = pl.multiple_of(t * B, 8)          # B padded to 8 -> sublane aligned
        h_chunk_ref[pl.ds(row, B), :] = h_new   # store is off the recurrence chain
        return h_new

    # Serial dependent chain; bounded partial unroll keeps LLO visibility
    # without exploding code size / vreg pressure for long chunks.
    h_final = lax.fori_loop(0, Tt, step, h_carry_ref[...], unroll=unroll)

    h_carry_ref[...] = h_final
    hT_ref[...] = h_final   # same block every step; last grid step's value persists

    # One batched MXU matmul + single lane-dense store for the whole chunk.
    # TODO(synk): interleave this projection every G recurrence steps to fill
    #             MXU-idle bundles of the dependent h-chain.
    out_ref[...] = (
        jnp.dot(h_chunk_ref[...], w_out_ref[...],
                preferred_element_type=jnp.float32)
        + b_out_ref[...])


def rnn_model_forward(inputs, state, params):
    """Equivalent of RNNModel.forward for a single-layer unidirectional tanh nn.RNN.

    inputs: (B, T) int32 token ids
    state:  (1, B, H) float32  (num_directions * num_layers = 1)
    returns (output (T*B, V), new_state (1, B, H))
    """
    V, H = params["w_ih"].shape
    B, T = inputs.shape

    H_pad = _round_up(H, 128)
    V_pad = _round_up(V, 128)
    B_pad = _round_up(B, 8)

    # Glue: one_hot(inputs.T) @ W_ih == row-gather of W_ih by token id.
    # Fold the recurrent bias in once here instead of per timestep.
    xw = jnp.take(params["w_ih"], inputs.T, axis=0) + params["b_h"]      # (T, B, H)

    # Zero padding keeps padded lanes/rows exactly zero through tanh and the
    # projection (padded w_out rows/cols are zero), so slicing back is exact.
    xw = jnp.pad(xw, ((0, 0), (0, B_pad - B), (0, H_pad - H)))
    h0 = jnp.pad(state[0], ((0, B_pad - B), (0, H_pad - H)))
    w_hh = jnp.pad(params["w_hh"], ((0, H_pad - H), (0, H_pad - H)))
    w_out = jnp.pad(params["w_out"], ((0, H_pad - H), (0, V_pad - V)))
    b_out = jnp.pad(params["b_out"], ((0, 0), (0, V_pad - V)))

    Tt = _choose_time_chunk(T, B_pad, H_pad, V_pad)
    n_chunks = T // Tt
    unroll = min(8, Tt)

    # VMEM budget from actual buffer sizes (pipelined blocks double-buffered,
    # resident weights, scratch) with headroom; capped well under physical VMEM.
    f32 = 4
    pipelined = 2 * Tt * B_pad * (H_pad + V_pad) * f32          # xw in + logits out
    resident = 2 * (H_pad * H_pad + H_pad * V_pad + V_pad + 2 * B_pad * H_pad) * f32
    scratch = (B_pad * H_pad + Tt * B_pad * H_pad) * f32
    vmem_limit = min(int(1.5 * (pipelined + resident + scratch)) + (4 << 20),
                     100 << 20)

    kernel = functools.partial(rnn_chunk_kernel, unroll=unroll)

    out_p, hT_p = pl.pallas_call(
        kernel,
        grid=(n_chunks,),
        out_shape=(
            jax.ShapeDtypeStruct((T * B_pad, V_pad), jnp.float32),
            jax.ShapeDtypeStruct((B_pad, H_pad), jnp.float32),
        ),
        in_specs=[
            pl.BlockSpec((B_pad, H_pad), lambda i: (0, 0)),            # h0
            pl.BlockSpec((Tt, B_pad, H_pad), lambda i: (i, 0, 0)),     # xw chunk
            pl.BlockSpec((H_pad, H_pad), lambda i: (0, 0)),            # w_hh
            pl.BlockSpec((H_pad, V_pad), lambda i: (0, 0)),            # w_out
            pl.BlockSpec((1, V_pad), lambda i: (0, 0)),                # b_out
        ],
        out_specs=(
            pl.BlockSpec((Tt * B_pad, V_pad), lambda i: (i, 0)),       # logits chunk
            pl.BlockSpec((B_pad, H_pad), lambda i: (0, 0)),            # hT
        ),
        scratch_shapes=[
            pltpu.VMEM((B_pad, H_pad), jnp.float32),                   # h carry
            pltpu.VMEM((Tt * B_pad, H_pad), jnp.float32),              # chunk h rows
        ],
        compiler_params=pltpu.CompilerParams(
            dimension_semantics=("arbitrary",),                        # serial carry
            vmem_limit_bytes=vmem_limit,
        ),
    )(h0, xw, w_hh, w_out, b_out)

    # Strip padding: (T*B_pad, V_pad) -> (T*B, V); (B_pad, H_pad) -> (1, B, H).
    out = out_p.reshape(T, B_pad, V_pad)[:, :B, :V].reshape(T * B, V)
    new_state = hT_p[:B, :H][None]
    return out, new_state


def ref_forward(inputs, state, params):
    """Pure-JAX reference (mirrors PyTorch semantics) for validation."""
    vocab_size = params["w_ih"].shape[0]
    x = jax.nn.one_hot(inputs.T, vocab_size, dtype=jnp.float32)      # (T, B, V)

    def step(h, x_t):
        h = jnp.tanh(x_t @ params["w_ih"] + h @ params["w_hh"] + params["b_h"][0])
        return h, h

    hT, ys = jax.lax.scan(step, state[0], x)
    out = ys.reshape(-1, ys.shape[-1]) @ params["w_out"] + params["b_out"][0]
    return out, hT[None]


def init_params(key, vocab_size, num_hiddens):
    """Deterministic init mirroring PyTorch shapes:
       nn.RNN(vocab_size, num_hiddens): W_ih (H,V), W_hh (H,H), b_ih/b_hh (H,)
       nn.Linear(num_hiddens, vocab_size): W (V,H), b (V,)
       Weights stored pre-transposed for right-multiplication in the kernel."""
    k = 1.0 / jnp.sqrt(jnp.float32(num_hiddens))
    ks = jax.random.split(key, 6)
    w_ih = jax.random.uniform(ks[0], (vocab_size, num_hiddens), jnp.float32, -k, k)
    w_hh = jax.random.uniform(ks[1], (num_hiddens, num_hiddens), jnp.float32, -k, k)
    b_ih = jax.random.uniform(ks[2], (num_hiddens,), jnp.float32, -k, k)
    b_hh = jax.random.uniform(ks[3], (num_hiddens,), jnp.float32, -k, k)
    w_out = jax.random.uniform(ks[4], (num_hiddens, vocab_size), jnp.float32, -k, k)
    b_out = jax.random.uniform(ks[5], (vocab_size,), jnp.float32, -k, k)
    return {
        "w_ih": w_ih,
        "w_hh": w_hh,
        "b_h": (b_ih + b_hh)[None, :],      # (1, H)
        "w_out": w_out,
        "b_out": b_out[None, :],            # (1, V)
    }


if __name__ == "__main__":
    VOCAB = 32
    HIDDEN = 32
    BATCH = 8
    SEQ = 8

    key = jax.random.PRNGKey(0)
    k_param, k_inp = jax.random.split(key)

    params = init_params(k_param, VOCAB, HIDDEN)
    inputs = jax.random.randint(k_inp, (BATCH, SEQ), 0, VOCAB, dtype=jnp.int32)
    state = jnp.zeros((1, BATCH, HIDDEN), jnp.float32)   # begin_state()

    out, new_state = jax.jit(rnn_model_forward)(inputs, state, params)
    out = jax.block_until_ready(out)
    new_state = jax.block_until_ready(new_state)

    ref_out, ref_state = ref_forward(inputs, state, params)
    assert out.shape == (SEQ * BATCH, VOCAB)
    assert new_state.shape == (1, BATCH, HIDDEN)
    assert jnp.allclose(out, ref_out, atol=1e-5, rtol=1e-5)
    assert jnp.allclose(new_state, ref_state, atol=1e-5, rtol=1e-5)

    print("KERNEL_OK")
</pallas_src>

<mosaic_0001>
module attributes {stable_mosaic.version = 11 : i64} {
  func.func @rnn_chunk_kernel(%arg0: i32, %arg1: memref<8x128xf32, #tpu.memory_space<vmem>>, %arg2: memref<8x8x128xf32, #tpu.memory_space<vmem>>, %arg3: memref<128x128xf32, #tpu.memory_space<vmem>>, %arg4: memref<128x128xf32, #tpu.memory_space<vmem>>, %arg5: memref<1x128xf32, #tpu.memory_space<vmem>>, %arg6: memref<64x128xf32, #tpu.memory_space<vmem>>, %arg7: memref<8x128xf32, #tpu.memory_space<vmem>>, %arg8: memref<8x128xf32, #tpu.memory_space<vmem>>, %arg9: memref<64x128xf32, #tpu.memory_space<vmem>>) attributes {dimension_semantics = [#tpu.dimension_semantics<arbitrary>], iteration_bounds = array<i64: 1>, scalar_prefetch = 0 : i64, scratch_operands = 2 : i64, tpu.core_type = #tpu.core_type<tc>, window_params = [{pipeline_mode = #tpu.pipeline_mode<synchronous>, transform_indices = @transform_0, window_bounds = array<i64: 8, 128>}, {transform_indices = @transform_1, window_bounds = array<i64: 8, 8, 128>}, {pipeline_mode = #tpu.pipeline_mode<synchronous>, transform_indices = @transform_2, window_bounds = array<i64: 128, 128>}, {pipeline_mode = #tpu.pipeline_mode<synchronous>, transform_indices = @transform_3, window_bounds = array<i64: 128, 128>}, {pipeline_mode = #tpu.pipeline_mode<synchronous>, transform_indices = @transform_4, window_bounds = array<i64: 1, 128>}, {transform_indices = @transform_5, window_bounds = array<i64: 64, 128>}, {pipeline_mode = #tpu.pipeline_mode<synchronous>, transform_indices = @transform_6, window_bounds = array<i64: 8, 128>}]} {
    %c0_i32 = arith.constant 0 : i32
    %0 = arith.cmpi eq, %arg0, %c0_i32 : i32
    %1 = arith.extui %0 : i1 to i32
    %c0_i32_0 = arith.constant 0 : i32
    %2 = arith.cmpi ne, %1, %c0_i32_0 : i32
    scf.if %2 {
      %c0_57 = arith.constant 0 : index
      %c0_58 = arith.constant 0 : index
      %94 = vector.load %arg1[%c0_57, %c0_58] : memref<8x128xf32, #tpu.memory_space<vmem>>, vector<8x128xf32>
      %c0_59 = arith.constant 0 : index
      %c0_60 = arith.constant 0 : index
      %95 = vector.load %arg8[%c0_59, %c0_60] : memref<8x128xf32, #tpu.memory_space<vmem>>, vector<8x128xf32>
      tpu.vector_store %arg8[%c0_59, %c0_60], %94 {strides = array<i32>} : memref<8x128xf32, #tpu.memory_space<vmem>>, vector<8x128xf32>,
    } else {
    }
    %c0 = arith.constant 0 : index
    %c0_1 = arith.constant 0 : index
    %3 = vector.load %arg3[%c0, %c0_1] : memref<128x128xf32, #tpu.memory_space<vmem>>, vector<128x128xf32>
    %c0_2 = arith.constant 0 : index
    %c0_3 = arith.constant 0 : index
    %4 = vector.load %arg8[%c0_2, %c0_3] : memref<8x128xf32, #tpu.memory_space<vmem>>, vector<8x128xf32>
    %c0_i32_4 = arith.constant 0 : i32
    %5 = arith.index_cast %c0_i32_4 : i32 to index
    %c0_5 = arith.constant 0 : index
    %c0_6 = arith.constant 0 : index
    %6 = vector.load %arg2[%5, %c0_5, %c0_6] : memref<8x8x128xf32, #tpu.memory_space<vmem>>, vector<1x8x128xf32>
    %7 = vector.shape_cast %6 : vector<1x8x128xf32> to vector<8x128xf32>
    %cst = arith.constant dense<0.000000e+00> : vector<8x128xf32>
    %8 = tpu.matmul %4, %3, %cst {dimension_numbers = #tpu.dot_dimension_numbers<[1], [0], [0], [1], [0, 0, 1, 1], [], []>} : vector<8x128xf32>, vector<128x128xf32>, vector<8x128xf32> -> vector<8x128xf32>
    %9 = arith.addf %7, %8 : vector<8x128xf32>
    %10 = math.tanh %9 : vector<8x128xf32>
    %c8_i32 = arith.constant 8 : i32
    %11 = arith.muli %c0_i32_4, %c8_i32 : i32
    %12 = tpu.assume_multiple %11, 8 : i32
    %13 = arith.index_cast %12 : i32 to index
    %c0_7 = arith.constant 0 : index
    %14 = vector.load %arg9[%13, %c0_7] : memref<64x128xf32, #tpu.memory_space<vmem>>, vector<8x128xf32>
    tpu.vector_store %arg9[%13, %c0_7], %10 {strides = array<i32>} : memref<64x128xf32, #tpu.memory_space<vmem>>, vector<8x128xf32>,
    %c1_i32 = arith.constant 1 : i32
    %15 = arith.index_cast %c1_i32 : i32 to index
    %c0_8 = arith.constant 0 : index
    %c0_9 = arith.constant 0 : index
    %16 = vector.load %arg2[%15, %c0_8, %c0_9] : memref<8x8x128xf32, #tpu.memory_space<vmem>>, vector<1x8x128xf32>
    %17 = vector.shape_cast %16 : vector<1x8x128xf32> to vector<8x128xf32>
    %cst_10 = arith.constant dense<0.000000e+00> : vector<8x128xf32>
    %18 = tpu.matmul %10, %3, %cst_10 {dimension_numbers = #tpu.dot_dimension_numbers<[1], [0], [0], [1], [0, 0, 1, 1], [], []>} : vector<8x128xf32>, vector<128x128xf32>, vector<8x128xf32> -> vector<8x128xf32>
    %19 = arith.addf %17, %18 : vector<8x128xf32>
    %20 = math.tanh %19 : vector<8x128xf32>
    %c8_i32_11 = arith.constant 8 : i32
    %21 = arith.muli %c1_i32, %c8_i32_11 : i32
    %22 = tpu.assume_multiple %21, 8 : i32
    %23 = arith.index_cast %22 : i32 to index
    %c0_12 = arith.constant 0 : index
    %24 = vector.load %arg9[%23, %c0_12] : memref<64x128xf32, #tpu.memory_space<vmem>>, vector<8x128xf32>
    tpu.vector_store %arg9[%23, %c0_12], %20 {strides = array<i32>} : memref<64x128xf32, #tpu.memory_space<vmem>>, vector<8x128xf32>,
    %c2_i32 = arith.constant 2 : i32
    %25 = arith.index_cast %c2_i32 : i32 to index
    %c0_13 = arith.constant 0 : index
    %c0_14 = arith.constant 0 : index
    %26 = vector.load %arg2[%25, %c0_13, %c0_14] : memref<8x8x128xf32, #tpu.memory_space<vmem>>, vector<1x8x128xf32>
    %27 = vector.shape_cast %26 : vector<1x8x128xf32> to vector<8x128xf32>
    %cst_15 = arith.constant dense<0.000000e+00> : vector<8x128xf32>
    %28 = tpu.matmul %20, %3, %cst_15 {dimension_numbers = #tpu.dot_dimension_numbers<[1], [0], [0], [1], [0, 0, 1, 1], [], []>} : vector<8x128xf32>, vector<128x128xf32>, vector<8x128xf32> -> vector<8x128xf32>
    %29 = arith.addf %27, %28 : vector<8x128xf32>
    %30 = math.tanh %29 : vector<8x128xf32>
    %c8_i32_16 = arith.constant 8 : i32
    %31 = arith.muli %c2_i32, %c8_i32_16 : i32
    %32 = tpu.assume_multiple %31, 8 : i32
    %33 = arith.index_cast %32 : i32 to index
    %c0_17 = arith.constant 0 : index
    %34 = vector.load %arg9[%33, %c0_17] : memref<64x128xf32, #tpu.memory_space<vmem>>, vector<8x128xf32>
    tpu.vector_store %arg9[%33, %c0_17], %30 {strides = array<i32>} : memref<64x128xf32, #tpu.memory_space<vmem>>, vector<8x128xf32>,
    %c3_i32 = arith.constant 3 : i32
    %35 = arith.index_cast %c3_i32 : i32 to index
    %c0_18 = arith.constant 0 : index
    %c0_19 = arith.constant 0 : index
    %36 = vector.load %arg2[%35, %c0_18, %c0_19] : memref<8x8x128xf32, #tpu.memory_space<vmem>>, vector<1x8x128xf32>
    %37 = vector.shape_cast %36 : vector<1x8x128xf32> to vector<8x128xf32>
    %cst_20 = arith.constant dense<0.000000e+00> : vector<8x128xf32>
    %38 = tpu.matmul %30, %3, %cst_20 {dimension_numbers = #tpu.dot_dimension_numbers<[1], [0], [0], [1], [0, 0, 1, 1], [], []>} : vector<8x128xf32>, vector<128x128xf32>, vector<8x128xf32> -> vector<8x128xf32>
    %39 = arith.addf %37, %38 : vector<8x128xf32>
    %40 = math.tanh %39 : vector<8x128xf32>
    %c8_i32_21 = arith.constant 8 : i32
    %41 = arith.muli %c3_i32, %c8_i32_21 : i32
    %42 = tpu.assume_multiple %41, 8 : i32
    %43 = arith.index_cast %42 : i32 to index
    %c0_22 = arith.constant 0 : index
    %44 = vector.load %arg9[%43, %c0_22] : memref<64x128xf32, #tpu.memory_space<vmem>>, vector<8x128xf32>
    tpu.vector_store %arg9[%43, %c0_22], %40 {strides = array<i32>} : memref<64x128xf32, #tpu.memory_space<vmem>>, vector<8x128xf32>,
    %c4_i32 = arith.constant 4 : i32
    %45 = arith.index_cast %c4_i32 : i32 to index
    %c0_23 = arith.constant 0 : index
    %c0_24 = arith.constant 0 : index
    %46 = vector.load %arg2[%45, %c0_23, %c0_24] : memref<8x8x128xf32, #tpu.memory_space<vmem>>, vector<1x8x128xf32>
    %47 = vector.shape_cast %46 : vector<1x8x128xf32> to vector<8x128xf32>
    %cst_25 = arith.constant dense<0.000000e+00> : vector<8x128xf32>
    %48 = tpu.matmul %40, %3, %cst_25 {dimension_numbers = #tpu.dot_dimension_numbers<[1], [0], [0], [1], [0, 0, 1, 1], [], []>} : vector<8x128xf32>, vector<128x128xf32>, vector<8x128xf32> -> vector<8x128xf32>
    %49 = arith.addf %47, %48 : vector<8x128xf32>
    %50 = math.tanh %49 : vector<8x128xf32>
    %c8_i32_26 = arith.constant 8 : i32
    %51 = arith.muli %c4_i32, %c8_i32_26 : i32
    %52 = tpu.assume_multiple %51, 8 : i32
    %53 = arith.index_cast %52 : i32 to index
    %c0_27 = arith.constant 0 : index
    %54 = vector.load %arg9[%53, %c0_27] : memref<64x128xf32, #tpu.memory_space<vmem>>, vector<8x128xf32>
    tpu.vector_store %arg9[%53, %c0_27], %50 {strides = array<i32>} : memref<64x128xf32, #tpu.memory_space<vmem>>, vector<8x128xf32>,
    %c5_i32 = arith.constant 5 : i32
    %55 = arith.index_cast %c5_i32 : i32 to index
    %c0_28 = arith.constant 0 : index
    %c0_29 = arith.constant 0 : index
    %56 = vector.load %arg2[%55, %c0_28, %c0_29] : memref<8x8x128xf32, #tpu.memory_space<vmem>>, vector<1x8x128xf32>
    %57 = vector.shape_cast %56 : vector<1x8x128xf32> to vector<8x128xf32>
    %cst_30 = arith.constant dense<0.000000e+00> : vector<8x128xf32>
    %58 = tpu.matmul %50, %3, %cst_30 {dimension_numbers = #tpu.dot_dimension_numbers<[1], [0], [0], [1], [0, 0, 1, 1], [], []>} : vector<8x128xf32>, vector<128x128xf32>, vector<8x128xf32> -> vector<8x128xf32>
    %59 = arith.addf %57, %58 : vector<8x128xf32>
    %60 = math.tanh %59 : vector<8x128xf32>
    %c8_i32_31 = arith.constant 8 : i32
    %61 = arith.muli %c5_i32, %c8_i32_31 : i32
    %62 = tpu.assume_multiple %61, 8 : i32
    %63 = arith.index_cast %62 : i32 to index
    %c0_32 = arith.constant 0 : index
    %64 = vector.load %arg9[%63, %c0_32] : memref<64x128xf32, #tpu.memory_space<vmem>>, vector<8x128xf32>
    tpu.vector_store %arg9[%63, %c0_32], %60 {strides = array<i32>} : memref<64x128xf32, #tpu.memory_space<vmem>>, vector<8x128xf32>,
    %c6_i32 = arith.constant 6 : i32
    %65 = arith.index_cast %c6_i32 : i32 to index
    %c0_33 = arith.constant 0 : index
    %c0_34 = arith.constant 0 : index
    %66 = vector.load %arg2[%65, %c0_33, %c0_34] : memref<8x8x128xf32, #tpu.memory_space<vmem>>, vector<1x8x128xf32>
    %67 = vector.shape_cast %66 : vector<1x8x128xf32> to vector<8x128xf32>
    %cst_35 = arith.constant dense<0.000000e+00> : vector<8x128xf32>
    %68 = tpu.matmul %60, %3, %cst_35 {dimension_numbers = #tpu.dot_dimension_numbers<[1], [0], [0], [1], [0, 0, 1, 1], [], []>} : vector<8x128xf32>, vector<128x128xf32>, vector<8x128xf32> -> vector<8x128xf32>
    %69 = arith.addf %67, %68 : vector<8x128xf32>
    %70 = math.tanh %69 : vector<8x128xf32>
    %c8_i32_36 = arith.constant 8 : i32
    %71 = arith.muli %c6_i32, %c8_i32_36 : i32
    %72 = tpu.assume_multiple %71, 8 : i32
    %73 = arith.index_cast %72 : i32 to index
    %c0_37 = arith.constant 0 : index
    %74 = vector.load %arg9[%73, %c0_37] : memref<64x128xf32, #tpu.memory_space<vmem>>, vector<8x128xf32>
    tpu.vector_store %arg9[%73, %c0_37], %70 {strides = array<i32>} : memref<64x128xf32, #tpu.memory_space<vmem>>, vector<8x128xf32>,
    %c7_i32 = arith.constant 7 : i32
    %75 = arith.index_cast %c7_i32 : i32 to index
    %c0_38 = arith.constant 0 : index
    %c0_39 = arith.constant 0 : index
    %76 = vector.load %arg2[%75, %c0_38, %c0_39] : memref<8x8x128xf32, #tpu.memory_space<vmem>>, vector<1x8x128xf32>
    %77 = vector.shape_cast %76 : vector<1x8x128xf32> to vector<8x128xf32>
    %cst_40 = arith.constant dense<0.000000e+00> : vector<8x128xf32>
    %78 = tpu.matmul %70, %3, %cst_40 {dimension_numbers = #tpu.dot_dimension_numbers<[1], [0], [0], [1], [0, 0, 1, 1], [], []>} : vector<8x128xf32>, vector<128x128xf32>, vector<8x128xf32> -> vector<8x128xf32>
    %79 = arith.addf %77, %78 : vector<8x128xf32>
    %80 = math.tanh %79 : vector<8x128xf32>
    %c8_i32_41 = arith.constant 8 : i32
    %81 = arith.muli %c7_i32, %c8_i32_41 : i32
    %82 = tpu.assume_multiple %81, 8 : i32
    %83 = arith.index_cast %82 : i32 to index
    %c0_42 = arith.constant 0 : index
    %84 = vector.load %arg9[%83, %c0_42] : memref<64x128xf32, #tpu.memory_space<vmem>>, vector<8x128xf32>
    tpu.vector_store %arg9[%83, %c0_42], %80 {strides = array<i32>} : memref<64x128xf32, #tpu.memory_space<vmem>>, vector<8x128xf32>,
    %c8_i32_43 = arith.constant 8 : i32
    %c0_44 = arith.constant 0 : index
    %c0_45 = arith.constant 0 : index
    %85 = vector.load %arg8[%c0_44, %c0_45] : memref<8x128xf32, #tpu.memory_space<vmem>>, vector<8x128xf32>
    tpu.vector_store %arg8[%c0_44, %c0_45], %80 {strides = array<i32>} : memref<8x128xf32, #tpu.memory_space<vmem>>, vector<8x128xf32>,
    %c0_46 = arith.constant 0 : index
    %c0_47 = arith.constant 0 : index
    %86 = vector.load %arg7[%c0_46, %c0_47] : memref<8x128xf32, #tpu.memory_space<vmem>>, vector<8x128xf32>
    tpu.vector_store %arg7[%c0_46, %c0_47], %80 {strides = array<i32>} : memref<8x128xf32, #tpu.memory_space<vmem>>, vector<8x128xf32>,
    %c0_48 = arith.constant 0 : index
    %c0_49 = arith.constant 0 : index
    %87 = vector.load %arg9[%c0_48, %c0_49] : memref<64x128xf32, #tpu.memory_space<vmem>>, vector<64x128xf32>
    %c0_50 = arith.constant 0 : index
    %c0_51 = arith.constant 0 : index
    %88 = vector.load %arg4[%c0_50, %c0_51] : memref<128x128xf32, #tpu.memory_space<vmem>>, vector<128x128xf32>
    %cst_52 = arith.constant dense<0.000000e+00> : vector<64x128xf32>
    %89 = tpu.matmul %87, %88, %cst_52 {dimension_numbers = #tpu.dot_dimension_numbers<[1], [0], [0], [1], [0, 0, 1, 1], [], []>} : vector<64x128xf32>, vector<128x128xf32>, vector<64x128xf32> -> vector<64x128xf32>
    %c0_53 = arith.constant 0 : index
    %c0_54 = arith.constant 0 : index
    %90 = vector.load %arg5[%c0_53, %c0_54] : memref<1x128xf32, #tpu.memory_space<vmem>>, vector<1x128xf32>
    %91 = vector.broadcast %90 : vector<1x128xf32> to vector<64x128xf32>
    %92 = arith.addf %89, %91 : vector<64x128xf32>
    %c0_55 = arith.constant 0 : index
    %c0_56 = arith.constant 0 : index
    %93 = vector.load %arg6[%c0_55, %c0_56] : memref<64x128xf32, #tpu.memory_space<vmem>>, vector<64x128xf32>
    tpu.vector_store %arg6[%c0_55, %c0_56], %92 {strides = array<i32>} : memref<64x128xf32, #tpu.memory_space<vmem>>, vector<64x128xf32>,
    return
  }
  func.func @transform_0(%arg0: i32) -> (i32, i32) {
    %c0_i32 = arith.constant 0 : i32
    %c0_i32_0 = arith.constant 0 : i32
    %c0_i32_1 = arith.constant 0 : i32
    return %c0_i32, %c0_i32_0 : i32, i32
  }
  func.func @transform_1(%arg0: i32) -> (i32, i32, i32) {
    %c0_i32 = arith.constant 0 : i32
    %c0_i32_0 = arith.constant 0 : i32
    %c0_i32_1 = arith.constant 0 : i32
    return %arg0, %c0_i32, %c0_i32_0 : i32, i32, i32
  }
  func.func @transform_2(%arg0: i32) -> (i32, i32) {
    %c0_i32 = arith.constant 0 : i32
    %c0_i32_0 = arith.constant 0 : i32
    %c0_i32_1 = arith.constant 0 : i32
    return %c0_i32, %c0_i32_0 : i32, i32
  }
  func.func @transform_3(%arg0: i32) -> (i32, i32) {
    %c0_i32 = arith.constant 0 : i32
    %c0_i32_0 = arith.constant 0 : i32
    %c0_i32_1 = arith.constant 0 : i32
    return %c0_i32, %c0_i32_0 : i32, i32
  }
  func.func @transform_4(%arg0: i32) -> (i32, i32) {
    %c0_i32 = arith.constant 0 : i32
    %c0_i32_0 = arith.constant 0 : i32
    %c0_i32_1 = arith.constant 0 : i32
    return %c0_i32, %c0_i32_0 : i32, i32
  }
  func.func @transform_5(%arg0: i32) -> (i32, i32) {
    %c0_i32 = arith.constant 0 : i32
    %c0_i32_0 = arith.constant 0 : i32
    return %arg0, %c0_i32 : i32, i32
  }
  func.func @transform_6(%arg0: i32) -> (i32, i32) {
    %c0_i32 = arith.constant 0 : i32
    %c0_i32_0 = arith.constant 0 : i32
    %c0_i32_1 = arith.constant 0 : i32
    return %c0_i32, %c0_i32_0 : i32, i32
  }
}

</mosaic_0001>

<llo_original>
// kernel: rnn_model_forward.1
$region0: #{rnn_model_forward.1}
  #allocation0 [shape = 'u32[]', space=smem, size = 0x4, offset = 0x4, fixed_abs, tag = 'smem constant byte address 0x4 - core index']
  #allocation1 [shape = 'u32[144,128]{1,0:T(1,128)}', space=vmem, size = 0x12000, scoped, tag = 'internal scratch']
  #allocation2 [shape = 'f32[8,128]{1,0:T(8,128)}', space=vmem, size = 0x1000, scoped, tag = 'scratch operand']
  #allocation3 [shape = 'f32[64,128]{1,0:T(8,128)}', space=vmem, size = 0x8000, scoped, tag = 'scratch operand']
  %s0 = inlined_call_operand.vmem [shape: f32[8,128], index: 0, kind: input, shape index: {}]
  %s1 = inlined_call_operand.vmem [shape: f32[8,8,128], index: 1, kind: input, shape index: {}]
  %s2 = inlined_call_operand.vmem [shape: f32[128,128], index: 2, kind: input, shape index: {}]
  %s3 = inlined_call_operand.vmem [shape: f32[128,128], index: 3, kind: input, shape index: {}]
  %s4 = inlined_call_operand.vmem [shape: f32[1,128], index: 4, kind: input, shape index: {}]
  %s5 = inlined_call_operand.vmem [shape: f32[64,128], index: 5, kind: output, shape index: {0}]
  %s6 = inlined_call_operand.vmem [shape: f32[8,128], index: 6, kind: output, shape index: {1}]
  %7 = xla_tuple %s5, %s6
  %s8 = sld [smem:[#allocation0]]
  $region42: #{rnn_model_forward.1} parent=0
    _
  %s10 = ssub.s32 1, %s8
  %s11 = scalar_select 0, %s10, %s8
  // Predicated region
  $region2: #{rnn_model_forward.1} parent=0 // pred_check
    _
  $region3: #{rnn_model_forward.1} parent=0 // pred_check_branch
    %13 = sbr.rel (0) target = $region5
  $region4: #{rnn_model_forward.1} parent=0 // pred_region
    _
  $region5: #{rnn_model_forward.1} parent=0 // pred_fallthru
    _
  // Predicated region
  $region6: #{rnn_model_forward.1} parent=0 // pred_check
    _
  $region7: #{rnn_model_forward.1} parent=0 // pred_check_branch
    %15 = sbr.rel (0) target = $region9
  $region8: #{rnn_model_forward.1} parent=0 // pred_region
    _
  $region9: #{rnn_model_forward.1} parent=0 // pred_fallthru
    _
  // Predicated region
  $region10: #{rnn_model_forward.1} parent=0 // pred_check
    _
  $region11: #{rnn_model_forward.1} parent=0 // pred_check_branch
    %17 = sbr.rel (0) target = $region13
  $region12: #{rnn_model_forward.1} parent=0 // pred_region
    _
  $region13: #{rnn_model_forward.1} parent=0 // pred_fallthru
    _
  // Predicated region
  $region14: #{rnn_model_forward.1} parent=0 // pred_check
    _
  $region15: #{rnn_model_forward.1} parent=0 // pred_check_branch
    %19 = sbr.rel (0) target = $region17
  $region16: #{rnn_model_forward.1} parent=0 // pred_region
    _
  $region17: #{rnn_model_forward.1} parent=0 // pred_fallthru
    _
  // Predicated region
  $region18: #{rnn_model_forward.1} parent=0 // pred_check
    _
  $region19: #{rnn_model_forward.1} parent=0 // pred_check_branch
    %21 = sbr.rel (0) target = $region21
  $region20: #{rnn_model_forward.1} parent=0 // pred_region
    _
  $region21: #{rnn_model_forward.1} parent=0 // pred_fallthru
    _
  %p22 = scmp.eq.s32.totalorder 0, 0
  // Predicated region
  $region22: #{rnn_model_forward.1} parent=0 // pred_check
    %p23 = pneg %p22
  $region23: #{rnn_model_forward.1} parent=0 // pred_check_branch
    %25 = sbr.rel (%p23) target = $region25
  $region24: #{rnn_model_forward.1} parent=0 // pred_region
    %v26 = vld [vmem:[%s0] sm:$0xff]
    %27 = vst [vmem:[#allocation2] sm:$0xff] %v26
  $region25: #{rnn_model_forward.1} parent=0 // pred_fallthru
    _
  %v28 = vld [vmem:[%s2] sm:$0xff]
  %v29 = vld [vmem:[%s2 + $0x8] sm:$0xff]
  %v30 = vld [vmem:[%s2 + $0x10] sm:$0xff]
  %v31 = vld [vmem:[%s2 + $0x18] sm:$0xff]
  %v32 = vld [vmem:[%s2 + $0x20] sm:$0xff]
  %v33 = vld [vmem:[%s2 + $0x28] sm:$0xff]
  %v34 = vld [vmem:[%s2 + $0x30] sm:$0xff]
  %v35 = vld [vmem:[%s2 + $0x38] sm:$0xff]
  %v36 = vld [vmem:[%s2 + $0x40] sm:$0xff]
  %v37 = vld [vmem:[%s2 + $0x48] sm:$0xff]
  %v38 = vld [vmem:[%s2 + $0x50] sm:$0xff]
  %v39 = vld [vmem:[%s2 + $0x58] sm:$0xff]
  %v40 = vld [vmem:[%s2 + $0x60] sm:$0xff]
  %v41 = vld [vmem:[%s2 + $0x68] sm:$0xff]
  %v42 = vld [vmem:[%s2 + $0x70] sm:$0xff]
  %v43 = vld [vmem:[%s2 + $0x78] sm:$0xff]
  %v44 = vld [vmem:[#allocation2] sm:$0xff]
  %v45 = vld [vmem:[%s1] sm:$0xff]
  %46 = vmatprep.subr.mxu0 0.0
  %47 = vmatpush1.msra.mxu0 %v43
  %48 = vmatprep.subr.mxu0 0.0
  %49 = vmatpush1.msra.mxu0 %v42
  %50 = vmatprep.subr.mxu0 0.0
  %51 = vmatpush1.msra.mxu0 %v41
  %52 = vmatprep.subr.mxu0 0.0
  %53 = vmatpush1.msra.mxu0 %v40
  %54 = vmatprep.subr.mxu0 0.0
  %55 = vmatpush1.msra.mxu0 %v39
  %56 = vmatprep.subr.mxu0 0.0
  %57 = vmatpush1.msra.mxu0 %v38
  %58 = vmatprep.subr.mxu0 0.0
  %59 = vmatpush1.msra.mxu0 %v37
  %60 = vmatprep.subr.mxu0 0.0
  %61 = vmatpush1.msra.mxu0 %v36
  %62 = vmatprep.subr.mxu0 0.0
  %63 = vmatpush1.msra.mxu0 %v35
  %64 = vmatprep.subr.mxu0 0.0
  %65 = vmatpush1.msra.mxu0 %v34
  %66 = vmatprep.subr.mxu0 0.0
  %67 = vmatpush1.msra.mxu0 %v33
  %68 = vmatprep.subr.mxu0 0.0
  %69 = vmatpush1.msra.mxu0 %v32
  %70 = vmatprep.subr.mxu0 0.0
  %71 = vmatpush1.msra.mxu0 %v31
  %72 = vmatprep.subr.mxu0 0.0
  %73 = vmatpush1.msra.mxu0 %v30
  %74 = vmatprep.subr.mxu0 0.0
  %75 = vmatpush1.msra.mxu0 %v29
  %76 = vmatprep.subr.mxu0 0.0
  %77 = vmatpush1.msra.mxu0 %v28
  %78 = vmatprep.subr.mxu0 0.0
  %79 = vmatpush2.msra.mxu0 0.0
  %80 = vmatprep.subr.mxu0 0.0
  %81 = vmatpush2.msra.mxu0 0.0
  %82 = vmatprep.subr.mxu0 0.0
  %83 = vmatpush2.msra.mxu0 0.0
  %84 = vmatprep.subr.mxu0 0.0
  %85 = vmatpush2.msra.mxu0 0.0
  %86 = vmatprep.subr.mxu0 0.0
  %87 = vmatpush2.msra.mxu0 0.0
  %88 = vmatprep.subr.mxu0 0.0
  %89 = vmatpush2.msra.mxu0 0.0
  %90 = vmatprep.subr.mxu0 0.0
  %91 = vmatpush2.msra.mxu0 0.0
  %92 = vmatprep.subr.mxu0 0.0
  %93 = vmatpush2.msra.mxu0 0.0
  %94 = vmatprep.subr.mxu0 0.0
  %95 = vmatpush2.msra.mxu0 0.0
  %96 = vmatprep.subr.mxu0 0.0
  %97 = vmatpush2.msra.mxu0 0.0
  %98 = vmatprep.subr.mxu0 0.0
  %99 = vmatpush2.msra.mxu0 0.0
  %100 = vmatprep.subr.mxu0 0.0
  %101 = vmatpush2.msra.mxu0 0.0
  %102 = vmatprep.subr.mxu0 0.0
  %103 = vmatpush2.msra.mxu0 0.0
  %104 = vmatprep.subr.mxu0 0.0
  %105 = vmatpush2.msra.mxu0 0.0
  %106 = vmatprep.subr.mxu0 0.0
  %107 = vmatpush2.msra.mxu0 0.0
  %108 = vmatprep.subr.mxu0 0.0
  %109 = vmatpush2.msra.mxu0 0.0
  %110 = vmatprep.mubr.f32.mxu0 0.0
  %111 = vmatmul.mubr.f32.gmra.mxu0 %v44
  %v112 = vpop.f32.mrf.mxu0
  %v113 = vadd.f32 0.0, %v112
  %v114 = vpop.f32.mrf.mxu0
  %115 = vdwg.mxu0
  %v116 = vadd.f32 %v45, %v113
  %v117 = vtanh.pop %v116
  %118 = vst [vmem:[#allocation3] sm:$0xff] %v117
  %s119 = scalar_lea.vmem %s1, 8
  %v120 = vld [vmem:[%s119] sm:$0xff]
  %121 = vmatprep.subr.mxu0 0.0
  %122 = vmatpush1.msra.mxu0 %v43
  %123 = vmatprep.subr.mxu0 0.0
  %124 = vmatpush1.msra.mxu0 %v42
  %125 = vmatprep.subr.mxu0 0.0
  %126 = vmatpush1.msra.mxu0 %v41
  %127 = vmatprep.subr.mxu0 0.0
  %128 = vmatpush1.msra.mxu0 %v40
  %129 = vmatprep.subr.mxu0 0.0
  %130 = vmatpush1.msra.mxu0 %v39
  %131 = vmatprep.subr.mxu0 0.0
  %132 = vmatpush1.msra.mxu0 %v38
  %133 = vmatprep.subr.mxu0 0.0
  %134 = vmatpush1.msra.mxu0 %v37
  %135 = vmatprep.subr.mxu0 0.0
  %136 = vmatpush1.msra.mxu0 %v36
  %137 = vmatprep.subr.mxu0 0.0
  %138 = vmatpush1.msra.mxu0 %v35
  %139 = vmatprep.subr.mxu0 0.0
  %140 = vmatpush1.msra.mxu0 %v34
  %141 = vmatprep.subr.mxu0 0.0
  %142 = vmatpush1.msra.mxu0 %v33
  %143 = vmatprep.subr.mxu0 0.0
  %144 = vmatpush1.msra.mxu0 %v32
  %145 = vmatprep.subr.mxu0 0.0
  %146 = vmatpush1.msra.mxu0 %v31
  %147 = vmatprep.subr.mxu0 0.0
  %148 = vmatpush1.msra.mxu0 %v30
  %149 = vmatprep.subr.mxu0 0.0
  %150 = vmatpush1.msra.mxu0 %v29
  %151 = vmatprep.subr.mxu0 0.0
  %152 = vmatpush1.msra.mxu0 %v28
  %153 = vmatprep.subr.mxu0 0.0
  %154 = vmatpush2.msra.mxu0 0.0
  %155 = vmatprep.subr.mxu0 0.0
  %156 = vmatpush2.msra.mxu0 0.0
  %157 = vmatprep.subr.mxu0 0.0
  %158 = vmatpush2.msra.mxu0 0.0
  %159 = vmatprep.subr.mxu0 0.0
  %160 = vmatpush2.msra.mxu0 0.0
  %161 = vmatprep.subr.mxu0 0.0
  %162 = vmatpush2.msra.mxu0 0.0
  %163 = vmatprep.subr.mxu0 0.0
  %164 = vmatpush2.msra.mxu0 0.0
  %165 = vmatprep.subr.mxu0 0.0
  %166 = vmatpush2.msra.mxu0 0.0
  %167 = vmatprep.subr.mxu0 0.0
  %168 = vmatpush2.msra.mxu0 0.0
  %169 = vmatprep.subr.mxu0 0.0
  %170 = vmatpush2.msra.mxu0 0.0
  %171 = vmatprep.subr.mxu0 0.0
  %172 = vmatpush2.msra.mxu0 0.0
  %173 = vmatprep.subr.mxu0 0.0
  %174 = vmatpush2.msra.mxu0 0.0
  %175 = vmatprep.subr.mxu0 0.0
  %176 = vmatpush2.msra.mxu0 0.0
  %177 = vmatprep.subr.mxu0 0.0
  %178 = vmatpush2.msra.mxu0 0.0
  %179 = vmatprep.subr.mxu0 0.0
  %180 = vmatpush2.msra.mxu0 0.0
  %181 = vmatprep.subr.mxu0 0.0
  %182 = vmatpush2.msra.mxu0 0.0
  %183 = vmatprep.subr.mxu0 0.0
  %184 = vmatpush2.msra.mxu0 0.0
  %185 = vmatprep.mubr.f32.mxu0 0.0
  %186 = vmatmul.mubr.f32.gmra.mxu0 %v117
  %v187 = vpop.f32.mrf.mxu0
  %v188 = vadd.f32 0.0, %v187
  %v189 = vpop.f32.mrf.mxu0
  %190 = vdwg.mxu0
  %v191 = vadd.f32 %v120, %v188
  %v192 = vtanh.pop %v191
  %s193 = scalar_lea.vmem [#allocation3], 8
  %194 = vst [vmem:[%s193] sm:$0xff] %v192
  %s195 = scalar_lea.vmem %s1, 16
  %v196 = vld [vmem:[%s195] sm:$0xff]
  %197 = vmatprep.subr.mxu0 0.0
  %198 = vmatpush1.msra.mxu0 %v43
  %199 = vmatprep.subr.mxu0 0.0
  %200 = vmatpush1.msra.mxu0 %v42
  %201 = vmatprep.subr.mxu0 0.0
  %202 = vmatpush1.msra.mxu0 %v41
  %203 = vmatprep.subr.mxu0 0.0
  %204 = vmatpush1.msra.mxu0 %v40
  %205 = vmatprep.subr.mxu0 0.0
  %206 = vmatpush1.msra.mxu0 %v39
  %207 = vmatprep.subr.mxu0 0.0
  %208 = vmatpush1.msra.mxu0 %v38
  %209 = vmatprep.subr.mxu0 0.0
  %210 = vmatpush1.msra.mxu0 %v37
  %211 = vmatprep.subr.mxu0 0.0
  %212 = vmatpush1.msra.mxu0 %v36
  %213 = vmatprep.subr.mxu0 0.0
  %214 = vmatpush1.msra.mxu0 %v35
  %215 = vmatprep.subr.mxu0 0.0
  %216 = vmatpush1.msra.mxu0 %v34
  %217 = vmatprep.subr.mxu0 0.0
  %218 = vmatpush1.msra.mxu0 %v33
  %219 = vmatprep.subr.mxu0 0.0
  %220 = vmatpush1.msra.mxu0 %v32
  %221 = vmatprep.subr.mxu0 0.0
  %222 = vmatpush1.msra.mxu0 %v31
  %223 = vmatprep.subr.mxu0 0.0
  %224 = vmatpush1.msra.mxu0 %v30
  %225 = vmatprep.subr.mxu0 0.0
  %226 = vmatpush1.msra.mxu0 %v29
  %227 = vmatprep.subr.mxu0 0.0
  %228 = vmatpush1.msra.mxu0 %v28
  %229 = vmatprep.subr.mxu0 0.0
  %230 = vmatpush2.msra.mxu0 0.0
  %231 = vmatprep.subr.mxu0 0.0
  %232 = vmatpush2.msra.mxu0 0.0
  %233 = vmatprep.subr.mxu0 0.0
  %234 = vmatpush2.msra.mxu0 0.0
  %235 = vmatprep.subr.mxu0 0.0
  %236 = vmatpush2.msra.mxu0 0.0
  %237 = vmatprep.subr.mxu0 0.0
  %238 = vmatpush2.msra.mxu0 0.0
  %239 = vmatprep.subr.mxu0 0.0
  %240 = vmatpush2.msra.mxu0 0.0
  %241 = vmatprep.subr.mxu0 0.0
  %242 = vmatpush2.msra.mxu0 0.0
  %243 = vmatprep.subr.mxu0 0.0
  %244 = vmatpush2.msra.mxu0 0.0
  %245 = vmatprep.subr.mxu0 0.0
  %246 = vmatpush2.msra.mxu0 0.0
  %247 = vmatprep.subr.mxu0 0.0
  %248 = vmatpush2.msra.mxu0 0.0
  %249 = vmatprep.subr.mxu0 0.0
  %250 = vmatpush2.msra.mxu0 0.0
  %251 = vmatprep.subr.mxu0 0.0
  %252 = vmatpush2.msra.mxu0 0.0
  %253 = vmatprep.subr.mxu0 0.0
  %254 = vmatpush2.msra.mxu0 0.0
  %255 = vmatprep.subr.mxu0 0.0
  %256 = vmatpush2.msra.mxu0 0.0
  %257 = vmatprep.subr.mxu0 0.0
  %258 = vmatpush2.msra.mxu0 0.0
  %259 = vmatprep.subr.mxu0 0.0
  %260 = vmatpush2.msra.mxu0 0.0
  %261 = vmatprep.mubr.f32.mxu0 0.0
  %262 = vmatmul.mubr.f32.gmra.mxu0 %v192
  %v263 = vpop.f32.mrf.mxu0
  %v264 = vadd.f32 0.0, %v263
  %v265 = vpop.f32.mrf.mxu0
  %266 = vdwg.mxu0
  %v267 = vadd.f32 %v196, %v264
  %v268 = vtanh.pop %v267
  %s269 = scalar_lea.vmem [#allocation3], 16
  %270 = vst [vmem:[%s269] sm:$0xff] %v268
  %s271 = scalar_lea.vmem %s1, 24
  %v272 = vld [vmem:[%s271] sm:$0xff]
  %273 = vmatprep.subr.mxu0 0.0
  %274 = vmatpush1.msra.mxu0 %v43
  %275 = vmatprep.subr.mxu0 0.0
  %276 = vmatpush1.msra.mxu0 %v42
  %277 = vmatprep.subr.mxu0 0.0
  %278 = vmatpush1.msra.mxu0 %v41
  %279 = vmatprep.subr.mxu0 0.0
  %280 = vmatpush1.msra.mxu0 %v40
  %281 = vmatprep.subr.mxu0 0.0
  %282 = vmatpush1.msra.mxu0 %v39
  %283 = vmatprep.subr.mxu0 0.0
  %284 = vmatpush1.msra.mxu0 %v38
  %285 = vmatprep.subr.mxu0 0.0
  %286 = vmatpush1.msra.mxu0 %v37
  %287 = vmatprep.subr.mxu0 0.0
  %288 = vmatpush1.msra.mxu0 %v36
  %289 = vmatprep.subr.mxu0 0.0
  %290 = vmatpush1.msra.mxu0 %v35
  %291 = vmatprep.subr.mxu0 0.0
  %292 = vmatpush1.msra.mxu0 %v34
  %293 = vmatprep.subr.mxu0 0.0
  %294 = vmatpush1.msra.mxu0 %v33
  %295 = vmatprep.subr.mxu0 0.0
  %296 = vmatpush1.msra.mxu0 %v32
  %297 = vmatprep.subr.mxu0 0.0
  %298 = vmatpush1.msra.mxu0 %v31
  %299 = vmatprep.subr.mxu0 0.0
  %300 = vmatpush1.msra.mxu0 %v30
  %301 = vmatprep.subr.mxu0 0.0
  %302 = vmatpush1.msra.mxu0 %v29
  %303 = vmatprep.subr.mxu0 0.0
  %304 = vmatpush1.msra.mxu0 %v28
  %305 = vmatprep.subr.mxu0 0.0
  %306 = vmatpush2.msra.mxu0 0.0
  %307 = vmatprep.subr.mxu0 0.0
  %308 = vmatpush2.msra.mxu0 0.0
  %309 = vmatprep.subr.mxu0 0.0
  %310 = vmatpush2.msra.mxu0 0.0
  %311 = vmatprep.subr.mxu0 0.0
  %312 = vmatpush2.msra.mxu0 0.0
  %313 = vmatprep.subr.mxu0 0.0
  %314 = vmatpush2.msra.mxu0 0.0
  %315 = vmatprep.subr.mxu0 0.0
  %316 = vmatpush2.msra.mxu0 0.0
  %317 = vmatprep.subr.mxu0 0.0
  %318 = vmatpush2.msra.mxu0 0.0
  %319 = vmatprep.subr.mxu0 0.0
  %320 = vmatpush2.msra.mxu0 0.0
  %321 = vmatprep.subr.mxu0 0.0
  %322 = vmatpush2.msra.mxu0 0.0
  %323 = vmatprep.subr.mxu0 0.0
  %324 = vmatpush2.msra.mxu0 0.0
  %325 = vmatprep.subr.mxu0 0.0
  %326 = vmatpush2.msra.mxu0 0.0
  %327 = vmatprep.subr.mxu0 0.0
  %328 = vmatpush2.msra.mxu0 0.0
  %329 = vmatprep.subr.mxu0 0.0
  %330 = vmatpush2.msra.mxu0 0.0
  %331 = vmatprep.subr.mxu0 0.0
  %332 = vmatpush2.msra.mxu0 0.0
  %333 = vmatprep.subr.mxu0 0.0
  %334 = vmatpush2.msra.mxu0 0.0
  %335 = vmatprep.subr.mxu0 0.0
  %336 = vmatpush2.msra.mxu0 0.0
  %337 = vmatprep.mubr.f32.mxu0 0.0
  %338 = vmatmul.mubr.f32.gmra.mxu0 %v268
  %v339 = vpop.f32.mrf.mxu0
  %v340 = vadd.f32 0.0, %v339
  %v341 = vpop.f32.mrf.mxu0
  %342 = vdwg.mxu0
  %v343 = vadd.f32 %v272, %v340
  %v344 = vtanh.pop %v343
  %s345 = scalar_lea.vmem [#allocation3], 24
  %346 = vst [vmem:[%s345] sm:$0xff] %v344
  %s347 = scalar_lea.vmem %s1, 32
  %v348 = vld [vmem:[%s347] sm:$0xff]
  %349 = vmatprep.subr.mxu0 0.0
  %350 = vmatpush1.msra.mxu0 %v43
  %351 = vmatprep.subr.mxu0 0.0
  %352 = vmatpush1.msra.mxu0 %v42
  %353 = vmatprep.subr.mxu0 0.0
  %354 = vmatpush1.msra.mxu0 %v41
  %355 = vmatprep.subr.mxu0 0.0
  %356 = vmatpush1.msra.mxu0 %v40
  %357 = vmatprep.subr.mxu0 0.0
  %358 = vmatpush1.msra.mxu0 %v39
  %359 = vmatprep.subr.mxu0 0.0
  %360 = vmatpush1.msra.mxu0 %v38
  %361 = vmatprep.subr.mxu0 0.0
  %362 = vmatpush1.msra.mxu0 %v37
  %363 = vmatprep.subr.mxu0 0.0
  %364 = vmatpush1.msra.mxu0 %v36
  %365 = vmatprep.subr.mxu0 0.0
  %366 = vmatpush1.msra.mxu0 %v35
  %367 = vmatprep.subr.mxu0 0.0
  %368 = vmatpush1.msra.mxu0 %v34
  %369 = vmatprep.subr.mxu0 0.0
  %370 = vmatpush1.msra.mxu0 %v33
  %371 = vmatprep.subr.mxu0 0.0
  %372 = vmatpush1.msra.mxu0 %v32
  %373 = vmatprep.subr.mxu0 0.0
  %374 = vmatpush1.msra.mxu0 %v31
  %375 = vmatprep.subr.mxu0 0.0
  %376 = vmatpush1.msra.mxu0 %v30
  %377 = vmatprep.subr.mxu0 0.0
  %378 = vmatpush1.msra.mxu0 %v29
  %379 = vmatprep.subr.mxu0 0.0
  %380 = vmatpush1.msra.mxu0 %v28
  %381 = vmatprep.subr.mxu0 0.0
  %382 = vmatpush2.msra.mxu0 0.0
  %383 = vmatprep.subr.mxu0 0.0
  %384 = vmatpush2.msra.mxu0 0.0
  %385 = vmatprep.subr.mxu0 0.0
  %386 = vmatpush2.msra.mxu0 0.0
  %387 = vmatprep.subr.mxu0 0.0
  %388 = vmatpush2.msra.mxu0 0.0
  %389 = vmatprep.subr.mxu0 0.0
  %390 = vmatpush2.msra.mxu0 0.0
  %391 = vmatprep.subr.mxu0 0.0
  %392 = vmatpush2.msra.mxu0 0.0
  %393 = vmatprep.subr.mxu0 0.0
  %394 = vmatpush2.msra.mxu0 0.0
  %395 = vmatprep.subr.mxu0 0.0
  %396 = vmatpush2.msra.mxu0 0.0
  %397 = vmatprep.subr.mxu0 0.0
  %398 = vmatpush2.msra.mxu0 0.0
  %399 = vmatprep.subr.mxu0 0.0
  %400 = vmatpush2.msra.mxu0 0.0
  %401 = vmatprep.subr.mxu0 0.0
  %402 = vmatpush2.msra.mxu0 0.0
  %403 = vmatprep.subr.mxu0 0.0
  %404 = vmatpush2.msra.mxu0 0.0
  %405 = vmatprep.subr.mxu0 0.0
  %406 = vmatpush2.msra.mxu0 0.0
  %407 = vmatprep.subr.mxu0 0.0
  %408 = vmatpush2.msra.mxu0 0.0
  %409 = vmatprep.subr.mxu0 0.0
  %410 = vmatpush2.msra.mxu0 0.0
  %411 = vmatprep.subr.mxu0 0.0
  %412 = vmatpush2.msra.mxu0 0.0
  %413 = vmatprep.mubr.f32.mxu0 0.0
  %414 = vmatmul.mubr.f32.gmra.mxu0 %v344
  %v415 = vpop.f32.mrf.mxu0
  %v416 = vadd.f32 0.0, %v415
  %v417 = vpop.f32.mrf.mxu0
  %418 = vdwg.mxu0
  %v419 = vadd.f32 %v348, %v416
  %v420 = vtanh.pop %v419
  %s421 = scalar_lea.vmem [#allocation3], 32
  %422 = vst [vmem:[%s421] sm:$0xff] %v420
  %s423 = scalar_lea.vmem %s1, 40
  %v424 = vld [vmem:[%s423] sm:$0xff]
  %425 = vmatprep.subr.mxu0 0.0
  %426 = vmatpush1.msra.mxu0 %v43
  %427 = vmatprep.subr.mxu0 0.0
  %428 = vmatpush1.msra.mxu0 %v42
  %429 = vmatprep.subr.mxu0 0.0
  %430 = vmatpush1.msra.mxu0 %v41
  %431 = vmatprep.subr.mxu0 0.0
  %432 = vmatpush1.msra.mxu0 %v40
  %433 = vmatprep.subr.mxu0 0.0
  %434 = vmatpush1.msra.mxu0 %v39
  %435 = vmatprep.subr.mxu0 0.0
  %436 = vmatpush1.msra.mxu0 %v38
  %437 = vmatprep.subr.mxu0 0.0
  %438 = vmatpush1.msra.mxu0 %v37
  %439 = vmatprep.subr.mxu0 0.0
  %440 = vmatpush1.msra.mxu0 %v36
  %441 = vmatprep.subr.mxu0 0.0
  %442 = vmatpush1.msra.mxu0 %v35
  %443 = vmatprep.subr.mxu0 0.0
  %444 = vmatpush1.msra.mxu0 %v34
  %445 = vmatprep.subr.mxu0 0.0
  %446 = vmatpush1.msra.mxu0 %v33
  %447 = vmatprep.subr.mxu0 0.0
  %448 = vmatpush1.msra.mxu0 %v32
  %449 = vmatprep.subr.mxu0 0.0
  %450 = vmatpush1.msra.mxu0 %v31
  %451 = vmatprep.subr.mxu0 0.0
  %452 = vmatpush1.msra.mxu0 %v30
  %453 = vmatprep.subr.mxu0 0.0
  %454 = vmatpush1.msra.mxu0 %v29
  %455 = vmatprep.subr.mxu0 0.0
  %456 = vmatpush1.msra.mxu0 %v28
  %457 = vmatprep.subr.mxu0 0.0
  %458 = vmatpush2.msra.mxu0 0.0
  %459 = vmatprep.subr.mxu0 0.0
  %460 = vmatpush2.msra.mxu0 0.0
  %461 = vmatprep.subr.mxu0 0.0
  %462 = vmatpush2.msra.mxu0 0.0
  %463 = vmatprep.subr.mxu0 0.0
  %464 = vmatpush2.msra.mxu0 0.0
  %465 = vmatprep.subr.mxu0 0.0
  %466 = vmatpush2.msra.mxu0 0.0
  %467 = vmatprep.subr.mxu0 0.0
  %468 = vmatpush2.msra.mxu0 0.0
  %469 = vmatprep.subr.mxu0 0.0
  %470 = vmatpush2.msra.mxu0 0.0
  %471 = vmatprep.subr.mxu0 0.0
  %472 = vmatpush2.msra.mxu0 0.0
  %473 = vmatprep.subr.mxu0 0.0
  %474 = vmatpush2.msra.mxu0 0.0
  %475 = vmatprep.subr.mxu0 0.0
  %476 = vmatpush2.msra.mxu0 0.0
  %477 = vmatprep.subr.mxu0 0.0
  %478 = vmatpush2.msra.mxu0 0.0
  %479 = vmatprep.subr.mxu0 0.0
  %480 = vmatpush2.msra.mxu0 0.0
  %481 = vmatprep.subr.mxu0 0.0
  %482 = vmatpush2.msra.mxu0 0.0
  %483 = vmatprep.subr.mxu0 0.0
  %484 = vmatpush2.msra.mxu0 0.0
  %485 = vmatprep.subr.mxu0 0.0
  %486 = vmatpush2.msra.mxu0 0.0
  %487 = vmatprep.subr.mxu0 0.0
  %488 = vmatpush2.msra.mxu0 0.0
  %489 = vmatprep.mubr.f32.mxu0 0.0
  %490 = vmatmul.mubr.f32.gmra.mxu0 %v420
  %v491 = vpop.f32.mrf.mxu0
  %v492 = vadd.f32 0.0, %v491
  %v493 = vpop.f32.mrf.mxu0
  %494 = vdwg.mxu0
  %v495 = vadd.f32 %v424, %v492
  %v496 = vtanh.pop %v495
  %s497 = scalar_lea.vmem [#allocation3], 40
  %498 = vst [vmem:[%s497] sm:$0xff] %v496
  %s499 = scalar_lea.vmem %s1, 48
  %v500 = vld [vmem:[%s499] sm:$0xff]
  %501 = vmatprep.subr.mxu0 0.0
  %502 = vmatpush1.msra.mxu0 %v43
  %503 = vmatprep.subr.mxu0 0.0
  %504 = vmatpush1.msra.mxu0 %v42
  %505 = vmatprep.subr.mxu0 0.0
  %506 = vmatpush1.msra.mxu0 %v41
  %507 = vmatprep.subr.mxu0 0.0
  %508 = vmatpush1.msra.mxu0 %v40
  %509 = vmatprep.subr.mxu0 0.0
  %510 = vmatpush1.msra.mxu0 %v39
  %511 = vmatprep.subr.mxu0 0.0
  %512 = vmatpush1.msra.mxu0 %v38
  %513 = vmatprep.subr.mxu0 0.0
  %514 = vmatpush1.msra.mxu0 %v37
  %515 = vmatprep.subr.mxu0 0.0
  %516 = vmatpush1.msra.mxu0 %v36
  %517 = vmatprep.subr.mxu0 0.0
  %518 = vmatpush1.msra.mxu0 %v35
  %519 = vmatprep.subr.mxu0 0.0
  %520 = vmatpush1.msra.mxu0 %v34
  %521 = vmatprep.subr.mxu0 0.0
  %522 = vmatpush1.msra.mxu0 %v33
  %523 = vmatprep.subr.mxu0 0.0
  %524 = vmatpush1.msra.mxu0 %v32
  %525 = vmatprep.subr.mxu0 0.0
  %526 = vmatpush1.msra.mxu0 %v31
  %527 = vmatprep.subr.mxu0 0.0
  %528 = vmatpush1.msra.mxu0 %v30
  %529 = vmatprep.subr.mxu0 0.0
  %530 = vmatpush1.msra.mxu0 %v29
  %531 = vmatprep.subr.mxu0 0.0
  %532 = vmatpush1.msra.mxu0 %v28
  %533 = vmatprep.subr.mxu0 0.0
  %534 = vmatpush2.msra.mxu0 0.0
  %535 = vmatprep.subr.mxu0 0.0
  %536 = vmatpush2.msra.mxu0 0.0
  %537 = vmatprep.subr.mxu0 0.0
  %538 = vmatpush2.msra.mxu0 0.0
  %539 = vmatprep.subr.mxu0 0.0
  %540 = vmatpush2.msra.mxu0 0.0
  %541 = vmatprep.subr.mxu0 0.0
  %542 = vmatpush2.msra.mxu0 0.0
  %543 = vmatprep.subr.mxu0 0.0
  %544 = vmatpush2.msra.mxu0 0.0
  %545 = vmatprep.subr.mxu0 0.0
  %546 = vmatpush2.msra.mxu0 0.0
  %547 = vmatprep.subr.mxu0 0.0
  %548 = vmatpush2.msra.mxu0 0.0
  %549 = vmatprep.subr.mxu0 0.0
  %550 = vmatpush2.msra.mxu0 0.0
  %551 = vmatprep.subr.mxu0 0.0
  %552 = vmatpush2.msra.mxu0 0.0
  %553 = vmatprep.subr.mxu0 0.0
  %554 = vmatpush2.msra.mxu0 0.0
  %555 = vmatprep.subr.mxu0 0.0
  %556 = vmatpush2.msra.mxu0 0.0
  %557 = vmatprep.subr.mxu0 0.0
  %558 = vmatpush2.msra.mxu0 0.0
  %559 = vmatprep.subr.mxu0 0.0
  %560 = vmatpush2.msra.mxu0 0.0
  %561 = vmatprep.subr.mxu0 0.0
  %562 = vmatpush2.msra.mxu0 0.0
  %563 = vmatprep.subr.mxu0 0.0
  %564 = vmatpush2.msra.mxu0 0.0
  %565 = vmatprep.mubr.f32.mxu0 0.0
  %566 = vmatmul.mubr.f32.gmra.mxu0 %v496
  %v567 = vpop.f32.mrf.mxu0
  %v568 = vadd.f32 0.0, %v567
  %v569 = vpop.f32.mrf.mxu0
  %570 = vdwg.mxu0
  %v571 = vadd.f32 %v500, %v568
  %v572 = vtanh.pop %v571
  %s573 = scalar_lea.vmem [#allocation3], 48
  %574 = vst [vmem:[%s573] sm:$0xff] %v572
  %s575 = scalar_lea.vmem %s1, 56
  %v576 = vld [vmem:[%s575] sm:$0xff]
  %577 = vmatprep.subr.mxu0 0.0
  %578 = vmatpush1.msra.mxu0 %v43
  %579 = vmatprep.subr.mxu0 0.0
  %580 = vmatpush1.msra.mxu0 %v42
  %581 = vmatprep.subr.mxu0 0.0
  %582 = vmatpush1.msra.mxu0 %v41
  %583 = vmatprep.subr.mxu0 0.0
  %584 = vmatpush1.msra.mxu0 %v40
  %585 = vmatprep.subr.mxu0 0.0
  %586 = vmatpush1.msra.mxu0 %v39
  %587 = vmatprep.subr.mxu0 0.0
  %588 = vmatpush1.msra.mxu0 %v38
  %589 = vmatprep.subr.mxu0 0.0
  %590 = vmatpush1.msra.mxu0 %v37
  %591 = vmatprep.subr.mxu0 0.0
  %592 = vmatpush1.msra.mxu0 %v36
  %593 = vmatprep.subr.mxu0 0.0
  %594 = vmatpush1.msra.mxu0 %v35
  %595 = vmatprep.subr.mxu0 0.0
  %596 = vmatpush1.msra.mxu0 %v34
  %597 = vmatprep.subr.mxu0 0.0
  %598 = vmatpush1.msra.mxu0 %v33
  %599 = vmatprep.subr.mxu0 0.0
  %600 = vmatpush1.msra.mxu0 %v32
  %601 = vmatprep.subr.mxu0 0.0
  %602 = vmatpush1.msra.mxu0 %v31
  %603 = vmatprep.subr.mxu0 0.0
  %604 = vmatpush1.msra.mxu0 %v30
  %605 = vmatprep.subr.mxu0 0.0
  %606 = vmatpush1.msra.mxu0 %v29
  %607 = vmatprep.subr.mxu0 0.0
  %608 = vmatpush1.msra.mxu0 %v28
  %609 = vmatprep.subr.mxu0 0.0
  %610 = vmatpush2.msra.mxu0 0.0
  %611 = vmatprep.subr.mxu0 0.0
  %612 = vmatpush2.msra.mxu0 0.0
  %613 = vmatprep.subr.mxu0 0.0
  %614 = vmatpush2.msra.mxu0 0.0
  %615 = vmatprep.subr.mxu0 0.0
  %616 = vmatpush2.msra.mxu0 0.0
  %617 = vmatprep.subr.mxu0 0.0
  %618 = vmatpush2.msra.mxu0 0.0
  %619 = vmatprep.subr.mxu0 0.0
  %620 = vmatpush2.msra.mxu0 0.0
  %621 = vmatprep.subr.mxu0 0.0
  %622 = vmatpush2.msra.mxu0 0.0
  %623 = vmatprep.subr.mxu0 0.0
  %624 = vmatpush2.msra.mxu0 0.0
  %625 = vmatprep.subr.mxu0 0.0
  %626 = vmatpush2.msra.mxu0 0.0
  %627 = vmatprep.subr.mxu0 0.0
  %628 = vmatpush2.msra.mxu0 0.0
  %629 = vmatprep.subr.mxu0 0.0
  %630 = vmatpush2.msra.mxu0 0.0
  %631 = vmatprep.subr.mxu0 0.0
  %632 = vmatpush2.msra.mxu0 0.0
  %633 = vmatprep.subr.mxu0 0.0
  %634 = vmatpush2.msra.mxu0 0.0
  %635 = vmatprep.subr.mxu0 0.0
  %636 = vmatpush2.msra.mxu0 0.0
  %637 = vmatprep.subr.mxu0 0.0
  %638 = vmatpush2.msra.mxu0 0.0
  %639 = vmatprep.subr.mxu0 0.0
  %640 = vmatpush2.msra.mxu0 0.0
  %641 = vmatprep.mubr.f32.mxu0 0.0
  %642 = vmatmul.mubr.f32.gmra.mxu0 %v572
  %v643 = vpop.f32.mrf.mxu0
  %v644 = vadd.f32 0.0, %v643
  %v645 = vpop.f32.mrf.mxu0
  %646 = vdwg.mxu0
  %v647 = vadd.f32 %v576, %v644
  %v648 = vtanh.pop %v647
  %s649 = scalar_lea.vmem [#allocation3], 56
  %650 = vst [vmem:[%s649] sm:$0xff] %v648
  %651 = vst [vmem:[#allocation2] sm:$0xff] %v648
  %652 = vst [vmem:[%s6] sm:$0xff] %v648
  %v653 = vld [vmem:[#allocation3] sm:$0xff]
  %v654 = vld [vmem:[#allocation3 + $0x8] sm:$0xff]
  %v655 = vld [vmem:[#allocation3 + $0x10] sm:$0xff]
  %v656 = vld [vmem:[#allocation3 + $0x18] sm:$0xff]
  %v657 = vld [vmem:[#allocation3 + $0x20] sm:$0xff]
  %v658 = vld [vmem:[#allocation3 + $0x28] sm:$0xff]
  %v659 = vld [vmem:[#allocation3 + $0x30] sm:$0xff]
  %v660 = vld [vmem:[#allocation3 + $0x38] sm:$0xff]
  %v661 = vld [vmem:[%s3] sm:$0xff]
  %v662 = vld [vmem:[%s3 + $0x8] sm:$0xff]
  %v663 = vld [vmem:[%s3 + $0x10] sm:$0xff]
  %v664 = vld [vmem:[%s3 + $0x18] sm:$0xff]
  %v665 = vld [vmem:[%s3 + $0x20] sm:$0xff]
  %v666 = vld [vmem:[%s3 + $0x28] sm:$0xff]
  %v667 = vld [vmem:[%s3 + $0x30] sm:$0xff]
  %v668 = vld [vmem:[%s3 + $0x38] sm:$0xff]
  %v669 = vld [vmem:[%s3 + $0x40] sm:$0xff]
  %v670 = vld [vmem:[%s3 + $0x48] sm:$0xff]
  %v671 = vld [vmem:[%s3 + $0x50] sm:$0xff]
  %v672 = vld [vmem:[%s3 + $0x58] sm:$0xff]
  %v673 = vld [vmem:[%s3 + $0x60] sm:$0xff]
  %v674 = vld [vmem:[%s3 + $0x68] sm:$0xff]
  %v675 = vld [vmem:[%s3 + $0x70] sm:$0xff]
  %v676 = vld [vmem:[%s3 + $0x78] sm:$0xff]
  %v677 = vld [vmem:[%s4] sm:$0x1]
  %v679 = vlaneseq
  %v680 = vshrl.u32 %v679, 7
  %v681 = vsub.s32 0, %v680
  %v682 = vrot.slane %v677, %v681
  %684 = vmatprep.subr.mxu0 0.0
  %685 = vmatpush1.msra.mxu0 %v676
  %686 = vmatprep.subr.mxu0 0.0
  %687 = vmatpush1.msra.mxu0 %v675
  %688 = vmatprep.subr.mxu0 0.0
  %689 = vmatpush1.msra.mxu0 %v674
  %690 = vmatprep.subr.mxu0 0.0
  %691 = vmatpush1.msra.mxu0 %v673
  %692 = vmatprep.subr.mxu0 0.0
  %693 = vmatpush1.msra.mxu0 %v672
  %694 = vmatprep.subr.mxu0 0.0
  %695 = vmatpush1.msra.mxu0 %v671
  %696 = vmatprep.subr.mxu0 0.0
  %697 = vmatpush1.msra.mxu0 %v670
  %698 = vmatprep.subr.mxu0 0.0
  %699 = vmatpush1.msra.mxu0 %v669
  %700 = vmatprep.subr.mxu0 0.0
  %701 = vmatpush1.msra.mxu0 %v668
  %702 = vmatprep.subr.mxu0 0.0
  %703 = vmatpush1.msra.mxu0 %v667
  %704 = vmatprep.subr.mxu0 0.0
  %705 = vmatpush1.msra.mxu0 %v666
  %706 = vmatprep.subr.mxu0 0.0
  %707 = vmatpush1.msra.mxu0 %v665
  %708 = vmatprep.subr.mxu0 0.0
  %709 = vmatpush1.msra.mxu0 %v664
  %710 = vmatprep.subr.mxu0 0.0
  %711 = vmatpush1.msra.mxu0 %v663
  %712 = vmatprep.subr.mxu0 0.0
  %713 = vmatpush1.msra.mxu0 %v662
  %714 = vmatprep.subr.mxu0 0.0
  %715 = vmatpush1.msra.mxu0 %v661
  %716 = vmatprep.subr.mxu0 0.0
  %717 = vmatpush2.msra.mxu0 0.0
  %718 = vmatprep.subr.mxu0 0.0
  %719 = vmatpush2.msra.mxu0 0.0
  %720 = vmatprep.subr.mxu0 0.0
  %721 = vmatpush2.msra.mxu0 0.0
  %722 = vmatprep.subr.mxu0 0.0
  %723 = vmatpush2.msra.mxu0 0.0
  %724 = vmatprep.subr.mxu0 0.0
  %725 = vmatpush2.msra.mxu0 0.0
  %726 = vmatprep.subr.mxu0 0.0
  %727 = vmatpush2.msra.mxu0 0.0
  %728 = vmatprep.subr.mxu0 0.0
  %729 = vmatpush2.msra.mxu0 0.0
  %730 = vmatprep.subr.mxu0 0.0
  %731 = vmatpush2.msra.mxu0 0.0
  %732 = vmatprep.subr.mxu0 0.0
  %733 = vmatpush2.msra.mxu0 0.0
  %734 = vmatprep.subr.mxu0 0.0
  %735 = vmatpush2.msra.mxu0 0.0
  %736 = vmatprep.subr.mxu0 0.0
  %737 = vmatpush2.msra.mxu0 0.0
  %738 = vmatprep.subr.mxu0 0.0
  %739 = vmatpush2.msra.mxu0 0.0
  %740 = vmatprep.subr.mxu0 0.0
  %741 = vmatpush2.msra.mxu0 0.0
  %742 = vmatprep.subr.mxu0 0.0
  %743 = vmatpush2.msra.mxu0 0.0
  %744 = vmatprep.subr.mxu0 0.0
  %745 = vmatpush2.msra.mxu0 0.0
  %746 = vmatprep.subr.mxu0 0.0
  %747 = vmatpush2.msra.mxu0 0.0
  %748 = vmatprep.mubr.f32.mxu0 0.0
  %749 = vmatmul.mubr.f32.gmra.mxu0 %v653
  %v750 = vpop.f32.mrf.mxu0
  %v751 = vadd.f32 %v682, %v750
  %v752 = vpop.f32.mrf.mxu0
  %753 = vmatprep.mubr.f32.mxu0 0.0
  %754 = vmatmul.mubr.f32.gmra.mxu0 %v654
  %v755 = vpop.f32.mrf.mxu0
  %v756 = vadd.f32 %v682, %v755
  %v757 = vpop.f32.mrf.mxu0
  %758 = vmatprep.mubr.f32.mxu0 0.0
  %759 = vmatmul.mubr.f32.gmra.mxu0 %v655
  %v760 = vpop.f32.mrf.mxu0
  %v761 = vadd.f32 %v682, %v760
  %v762 = vpop.f32.mrf.mxu0
  %763 = vmatprep.mubr.f32.mxu0 0.0
  %764 = vmatmul.mubr.f32.gmra.mxu0 %v656
  %v765 = vpop.f32.mrf.mxu0
  %v766 = vadd.f32 %v682, %v765
  %v767 = vpop.f32.mrf.mxu0
  %768 = vmatprep.mubr.f32.mxu0 0.0
  %769 = vmatmul.mubr.f32.gmra.mxu0 %v657
  %v770 = vpop.f32.mrf.mxu0
  %v771 = vadd.f32 %v682, %v770
  %v772 = vpop.f32.mrf.mxu0
  %773 = vmatprep.mubr.f32.mxu0 0.0
  %774 = vmatmul.mubr.f32.gmra.mxu0 %v658
  %v775 = vpop.f32.mrf.mxu0
  %v776 = vadd.f32 %v682, %v775
  %v777 = vpop.f32.mrf.mxu0
  %778 = vmatprep.mubr.f32.mxu0 0.0
  %779 = vmatmul.mubr.f32.gmra.mxu0 %v659
  %v780 = vpop.f32.mrf.mxu0
  %v781 = vadd.f32 %v682, %v780
  %v782 = vpop.f32.mrf.mxu0
  %783 = vmatprep.mubr.f32.mxu0 0.0
  %784 = vmatmul.mubr.f32.gmra.mxu0 %v660
  %v785 = vpop.f32.mrf.mxu0
  %v786 = vadd.f32 %v682, %v785
  %v787 = vpop.f32.mrf.mxu0
  %788 = vdwg.mxu0
  %789 = vst [vmem:[%s5] sm:$0xff] %v751
  %790 = vst [vmem:[%s5 + $0x8] sm:$0xff] %v756
  %791 = vst [vmem:[%s5 + $0x10] sm:$0xff] %v761
  %792 = vst [vmem:[%s5 + $0x18] sm:$0xff] %v766
  %793 = vst [vmem:[%s5 + $0x20] sm:$0xff] %v771
  %794 = vst [vmem:[%s5 + $0x28] sm:$0xff] %v776
  %795 = vst [vmem:[%s5 + $0x30] sm:$0xff] %v781
  %796 = vst [vmem:[%s5 + $0x38] sm:$0xff] %v786
  // Predicated region
  $region26: #{rnn_model_forward.1} parent=0 // pred_check
    _
  $region27: #{rnn_model_forward.1} parent=0 // pred_check_branch
    %798 = sbr.rel (0) target = $region29
  $region28: #{rnn_model_forward.1} parent=0 // pred_region
    _
  $region29: #{rnn_model_forward.1} parent=0 // pred_fallthru
    _
  // Predicated region
  $region30: #{rnn_model_forward.1} parent=0 // pred_check
    _
  $region31: #{rnn_model_forward.1} parent=0 // pred_check_branch
    %800 = sbr.rel (0) target = $region33
  $region32: #{rnn_model_forward.1} parent=0 // pred_region
    _
  $region33: #{rnn_model_forward.1} parent=0 // pred_fallthru
    _
  // Predicated region
  $region34: #{rnn_model_forward.1} parent=0 // pred_check
    _
  $region35: #{rnn_model_forward.1} parent=0 // pred_check_branch
    %802 = sbr.rel (0) target = $region37
  $region36: #{rnn_model_forward.1} parent=0 // pred_region
    _
  $region37: #{rnn_model_forward.1} parent=0 // pred_fallthru
    _
  // Predicated region
  $region38: #{rnn_model_forward.1} parent=0 // pred_check
    _
  $region39: #{rnn_model_forward.1} parent=0 // pred_check_branch
    %804 = sbr.rel (0) target = $region41
  $region40: #{rnn_model_forward.1} parent=0 // pred_region
    _
  $region41: #{rnn_model_forward.1} parent=0 // pred_fallthru
    _

</llo_original>
